<compile_context>
chip_gen: v7x
topology: tpu7x:2x2x1
jax: 0.10.0
libtpu: 0.0.40
codegen_flags: <defaults>
</compile_context>

<pallas_src>
import jax
import jax.numpy as jnp
from jax import lax
from jax.experimental import pallas as pl
from jax.experimental.pallas import tpu as pltpu


def _mtl_kernel(x_ref, w1_ref, b1_ref, w2_ref, b2_ref,
                w3_ref, b3_ref, w4_ref, b4_ref, o_ref):
    # x tile arrives in its native dtype; cast on the VPU (slot has huge slack).
    # NOTE: bf16 matmuls with f32 accumulation deviate slightly from the f32
    # PyTorch reference; keep x/layer-1 in f32 if closer parity is ever needed.
    x_bf = x_ref[...].astype(jnp.bfloat16)                       # (tile_b, in)

    # Layer 1: (hidden, in) . (tile_b, in)^T -> (hidden, tile_b).
    # Batch lands on the lane axis and stays there for the whole network.
    h = lax.dot_general(w1_ref[...], x_bf,
                        dimension_numbers=(((1,), (1,)), ((), ())),
                        preferred_element_type=jnp.float32)
    h = jnp.maximum(h + b1_ref[...], 0.0).astype(jnp.bfloat16)   # (hidden, tile_b)

    h = jnp.dot(w2_ref[...], h, preferred_element_type=jnp.float32)
    h = jnp.maximum(h + b2_ref[...], 0.0).astype(jnp.bfloat16)   # (hidden, tile_b)

    enc = jnp.dot(w3_ref[...], h, preferred_element_type=jnp.float32)
    enc = jnp.maximum(enc + b3_ref[...], 0.0).astype(jnp.bfloat16)  # (out, tile_b)

    # accept head: (1, out) @ (out, tile_b) -> (1, tile_b), lane-dense store.
    acc = jnp.dot(w4_ref[...], enc, preferred_element_type=jnp.float32)
    o_ref[...] = jnp.maximum(acc + b4_ref[...], 0.0)


def _round_up(n, m):
    return ((n + m - 1) // m) * m


def _choose_tile_b(B, in_size, hidden, out_size, itemsize):
    """Rows per grid step: multiple of 128 (lane-dense output), ~>=1 MiB of x per
    step (DMA >> ~0.35us step overhead), capped by a VMEM budget that fits v7x,
    and split into >=2 steps for large batches so both v7x TensorCores are fed."""
    row_bytes = max(1, in_size * itemsize)
    target = _round_up(max(512, (1 << 20) // row_bytes), 128)
    # crude per-row VMEM bill: double-buffered x tile + bf16 x copy + f32/bf16
    # copies of the (lane-dense) intermediate activations.
    per_row = 2 * row_bytes + 2 * in_size + 6 * (2 * hidden + out_size) + 8
    cap = max(128, (((16 << 20) // per_row) // 128) * 128)
    tile = min(target, cap, 8192)
    tile = min(tile, _round_up(B, 128))
    if B > 1024 and pl.cdiv(B, tile) < 2:        # keep >=2 parallel steps (v7x megacore)
        tile = max(128, _round_up(pl.cdiv(B, 2), 128))
    return tile


def mtl_influencer_forward(x, params, *, tile_b=None):
    """x: (B, input_size) in any real dtype (cast happens inside the kernel).
    params: torch-layout (out, in) weights + (out,) biases.
    Returns the accept head, shape (B, 1), float32 (== MTLInfluencer.forward)."""
    B, in_size = x.shape

    # Torch-layout weights used directly (no transposes); bf16 on the MXU with
    # f32 accumulation.  Biases stay f32, shaped (features, 1) so they broadcast
    # across the lane (batch) axis.  At larger model sizes, pre-cast params once
    # outside the per-call path.
    w1 = params["w1"].astype(jnp.bfloat16)                 # (hidden, in)
    w2 = params["w2"].astype(jnp.bfloat16)                 # (hidden, hidden)
    w3 = params["w3"].astype(jnp.bfloat16)                 # (out, hidden)
    w4 = params["w4"].astype(jnp.bfloat16)                 # (1, out)
    b1 = params["b1"].reshape(-1, 1).astype(jnp.float32)
    b2 = params["b2"].reshape(-1, 1).astype(jnp.float32)
    b3 = params["b3"].reshape(-1, 1).astype(jnp.float32)
    b4 = params["b4"].reshape(1, 1).astype(jnp.float32)

    hidden = w1.shape[0]
    out_size = w3.shape[0]

    if tile_b is None:
        tile_b = _choose_tile_b(B, in_size, hidden, out_size, x.dtype.itemsize)
    tile_b = max(128, _round_up(tile_b, 128))              # lane-dense output blocks

    x_in = x
    if B < tile_b:
        # Single-block path: pad by a handful of rows so the one x block exactly
        # covers the array (negligible copy).  Large batches are NEVER padded -
        # the final grid step simply reads a partial tail block.
        x_in = jnp.pad(x, ((0, tile_b - B), (0, 0)))

    steps = pl.cdiv(B, tile_b)
    b_pad = steps * tile_b     # freshly allocated output; padded cols sliced off

    def const(shape):
        return pl.BlockSpec(shape, lambda i: (0,) * len(shape))

    lin_flops = in_size * hidden + hidden * hidden + hidden * out_size + out_size
    cost = pl.CostEstimate(
        flops=2 * B * lin_flops,
        transcendentals=0,
        bytes_accessed=(B * in_size * x.dtype.itemsize        # x, native dtype
                        + 2 * lin_flops                        # bf16 weights
                        + 4 * (2 * hidden + out_size + 1)      # f32 biases
                        + 4 * b_pad),                          # f32 output
    )

    out = pl.pallas_call(
        _mtl_kernel,
        out_shape=jax.ShapeDtypeStruct((1, b_pad), jnp.float32),
        grid_spec=pltpu.PrefetchScalarGridSpec(
            num_scalar_prefetch=0,
            grid=(steps,),
            in_specs=[
                pl.BlockSpec((tile_b, in_size), lambda i: (i, 0)),   # x tile
                const(w1.shape), const(b1.shape),
                const(w2.shape), const(b2.shape),
                const(w3.shape), const(b3.shape),
                const(w4.shape), const(b4.shape),
            ],
            out_specs=pl.BlockSpec((1, tile_b), lambda i: (0, i)),   # lane-dense head
        ),
        compiler_params=pltpu.CompilerParams(
            dimension_semantics=("parallel",),
            vmem_limit_bytes=32 * 1024 * 1024),
        cost_estimate=cost,
    )(x_in, w1, b1, w2, b2, w3, b3, w4, b4)

    # (1, b_pad) with batch on lanes -> (B, 1) float32; padded tail columns
    # (from the partial x block) are dropped here and never consumed elsewhere.
    return out[:, :B].reshape(B, 1)


def init_params(key, input_size, hidden_size, output_size):
    ks = jax.random.split(key, 8)

    def lin(kw, kb, fan_in, fan_out):
        bound = 1.0 / jnp.sqrt(fan_in)
        w = jax.random.uniform(kw, (fan_out, fan_in), jnp.float32, -bound, bound)
        b = jax.random.uniform(kb, (fan_out,), jnp.float32, -bound, bound)
        return w, b

    w1, b1 = lin(ks[0], ks[1], input_size, hidden_size)
    w2, b2 = lin(ks[2], ks[3], hidden_size, hidden_size)
    w3, b3 = lin(ks[4], ks[5], hidden_size, output_size)
    w4, b4 = lin(ks[6], ks[7], output_size, 1)
    return dict(w1=w1, b1=b1, w2=w2, b2=b2, w3=w3, b3=b3, w4=w4, b4=b4)


def _reference(x, p):
    def lin_relu(h, w, b):
        return jnp.maximum(h @ w.T + b, 0.0)
    h = lin_relu(x.astype(jnp.float32), p["w1"], p["b1"])
    h = lin_relu(h, p["w2"], p["b2"])
    h = lin_relu(h, p["w3"], p["b3"])
    return lin_relu(h, p["w4"], p["b4"])


if __name__ == "__main__":
    key = jax.random.PRNGKey(0)
    kx, kp, kx2 = jax.random.split(key, 3)

    input_size, hidden_size, output_size = 32, 32, 16
    params = init_params(kp, input_size, hidden_size, output_size)

    # Small batch: single block (128-row, lane-dense output), no per-step grid overhead.
    x = jax.random.normal(kx, (16, input_size), jnp.float32)
    out = jax.block_until_ready(mtl_influencer_forward(x, params))
    ref = _reference(x, params)
    assert out.shape == (16, 1)
    # bf16 matmuls with f32 accumulation -> loosened tolerance vs f32 reference.
    assert jnp.allclose(out, ref, atol=5e-2, rtol=5e-2), "mismatch vs reference (small batch)"

    # Batch that does NOT divide the tile: multi-step parallel grid with a
    # partial tail block and no wrapper-side padding pass over x.
    x2 = jax.random.normal(kx2, (300, input_size), jnp.float32)
    out2 = jax.block_until_ready(mtl_influencer_forward(x2, params, tile_b=128))
    ref2 = _reference(x2, params)
    assert out2.shape == (300, 1)
    assert jnp.allclose(out2, ref2, atol=5e-2, rtol=5e-2), "mismatch vs reference (tail block)"

    print("KERNEL_OK")
</pallas_src>

<mosaic_0001>
module attributes {stable_mosaic.version = 11 : i64} {
  func.func @_mtl_kernel(%arg0: i32, %arg1: memref<128x32xf32, #tpu.memory_space<vmem>>, %arg2: memref<32x32xbf16, #tpu.memory_space<vmem>>, %arg3: memref<32x1xf32, #tpu.memory_space<vmem>>, %arg4: memref<32x32xbf16, #tpu.memory_space<vmem>>, %arg5: memref<32x1xf32, #tpu.memory_space<vmem>>, %arg6: memref<16x32xbf16, #tpu.memory_space<vmem>>, %arg7: memref<16x1xf32, #tpu.memory_space<vmem>>, %arg8: memref<1x16xbf16, #tpu.memory_space<vmem>>, %arg9: memref<1x1xf32, #tpu.memory_space<vmem>>, %arg10: memref<1x128xf32, #tpu.memory_space<vmem>>) attributes {dimension_semantics = [#tpu.dimension_semantics<parallel>], iteration_bounds = array<i64: 1>, scalar_prefetch = 0 : i64, scratch_operands = 0 : i64, tpu.core_type = #tpu.core_type<tc>, window_params = [{transform_indices = @transform_0, window_bounds = array<i64: 128, 32>}, {pipeline_mode = #tpu.pipeline_mode<synchronous>, transform_indices = @transform_1, window_bounds = array<i64: 32, 32>}, {pipeline_mode = #tpu.pipeline_mode<synchronous>, transform_indices = @transform_2, window_bounds = array<i64: 32, 1>}, {pipeline_mode = #tpu.pipeline_mode<synchronous>, transform_indices = @transform_3, window_bounds = array<i64: 32, 32>}, {pipeline_mode = #tpu.pipeline_mode<synchronous>, transform_indices = @transform_4, window_bounds = array<i64: 32, 1>}, {pipeline_mode = #tpu.pipeline_mode<synchronous>, transform_indices = @transform_5, window_bounds = array<i64: 16, 32>}, {pipeline_mode = #tpu.pipeline_mode<synchronous>, transform_indices = @transform_6, window_bounds = array<i64: 16, 1>}, {pipeline_mode = #tpu.pipeline_mode<synchronous>, transform_indices = @transform_7, window_bounds = array<i64: 1, 16>}, {pipeline_mode = #tpu.pipeline_mode<synchronous>, transform_indices = @transform_8, window_bounds = array<i64: 1, 1>}, {transform_indices = @transform_9, window_bounds = array<i64: 1, 128>}]} {
    %c0 = arith.constant 0 : index
    %c0_0 = arith.constant 0 : index
    %0 = vector.load %arg1[%c0, %c0_0] : memref<128x32xf32, #tpu.memory_space<vmem>>, vector<128x32xf32>
    %1 = arith.truncf %0 : vector<128x32xf32> to vector<128x32xbf16>
    %c0_1 = arith.constant 0 : index
    %c0_2 = arith.constant 0 : index
    %2 = vector.load %arg2[%c0_1, %c0_2] : memref<32x32xbf16, #tpu.memory_space<vmem>>, vector<32x32xbf16>
    %cst = arith.constant dense<0.000000e+00> : vector<32x128xf32>
    %3 = tpu.matmul %2, %1, %cst {dimension_numbers = #tpu.dot_dimension_numbers<[1], [1], [0], [0], [0, 0, 1, 0], [], []>} : vector<32x32xbf16>, vector<128x32xbf16>, vector<32x128xf32> -> vector<32x128xf32>
    %c0_3 = arith.constant 0 : index
    %c0_4 = arith.constant 0 : index
    %4 = vector.load %arg3[%c0_3, %c0_4] : memref<32x1xf32, #tpu.memory_space<vmem>>, vector<32x1xf32>
    %5 = vector.broadcast %4 : vector<32x1xf32> to vector<32x128xf32>
    %6 = arith.addf %3, %5 : vector<32x128xf32>
    %cst_5 = arith.constant 0.000000e+00 : f32
    %7 = vector.broadcast %cst_5 : f32 to vector<32x128xf32>
    %8 = arith.maximumf %6, %7 : vector<32x128xf32>
    %9 = arith.truncf %8 : vector<32x128xf32> to vector<32x128xbf16>
    %c0_6 = arith.constant 0 : index
    %c0_7 = arith.constant 0 : index
    %10 = vector.load %arg4[%c0_6, %c0_7] : memref<32x32xbf16, #tpu.memory_space<vmem>>, vector<32x32xbf16>
    %cst_8 = arith.constant dense<0.000000e+00> : vector<32x128xf32>
    %11 = tpu.matmul %10, %9, %cst_8 {dimension_numbers = #tpu.dot_dimension_numbers<[1], [0], [0], [1], [0, 0, 1, 1], [], []>} : vector<32x32xbf16>, vector<32x128xbf16>, vector<32x128xf32> -> vector<32x128xf32>
    %c0_9 = arith.constant 0 : index
    %c0_10 = arith.constant 0 : index
    %12 = vector.load %arg5[%c0_9, %c0_10] : memref<32x1xf32, #tpu.memory_space<vmem>>, vector<32x1xf32>
    %13 = vector.broadcast %12 : vector<32x1xf32> to vector<32x128xf32>
    %14 = arith.addf %11, %13 : vector<32x128xf32>
    %cst_11 = arith.constant 0.000000e+00 : f32
    %15 = vector.broadcast %cst_11 : f32 to vector<32x128xf32>
    %16 = arith.maximumf %14, %15 : vector<32x128xf32>
    %17 = arith.truncf %16 : vector<32x128xf32> to vector<32x128xbf16>
    %c0_12 = arith.constant 0 : index
    %c0_13 = arith.constant 0 : index
    %18 = vector.load %arg6[%c0_12, %c0_13] : memref<16x32xbf16, #tpu.memory_space<vmem>>, vector<16x32xbf16>
    %cst_14 = arith.constant dense<0.000000e+00> : vector<16x128xf32>
    %19 = tpu.matmul %18, %17, %cst_14 {dimension_numbers = #tpu.dot_dimension_numbers<[1], [0], [0], [1], [0, 0, 1, 1], [], []>} : vector<16x32xbf16>, vector<32x128xbf16>, vector<16x128xf32> -> vector<16x128xf32>
    %c0_15 = arith.constant 0 : index
    %c0_16 = arith.constant 0 : index
    %20 = vector.load %arg7[%c0_15, %c0_16] : memref<16x1xf32, #tpu.memory_space<vmem>>, vector<16x1xf32>
    %21 = vector.broadcast %20 : vector<16x1xf32> to vector<16x128xf32>
    %22 = arith.addf %19, %21 : vector<16x128xf32>
    %cst_17 = arith.constant 0.000000e+00 : f32
    %23 = vector.broadcast %cst_17 : f32 to vector<16x128xf32>
    %24 = arith.maximumf %22, %23 : vector<16x128xf32>
    %25 = arith.truncf %24 : vector<16x128xf32> to vector<16x128xbf16>
    %c0_18 = arith.constant 0 : index
    %c0_19 = arith.constant 0 : index
    %26 = vector.load %arg8[%c0_18, %c0_19] : memref<1x16xbf16, #tpu.memory_space<vmem>>, vector<1x16xbf16>
    %cst_20 = arith.constant dense<0.000000e+00> : vector<1x128xf32>
    %27 = tpu.matmul %26, %25, %cst_20 {dimension_numbers = #tpu.dot_dimension_numbers<[1], [0], [0], [1], [0, 0, 1, 1], [], []>} : vector<1x16xbf16>, vector<16x128xbf16>, vector<1x128xf32> -> vector<1x128xf32>
    %c0_21 = arith.constant 0 : index
    %c0_22 = arith.constant 0 : index
    %28 = vector.load %arg9[%c0_21, %c0_22] : memref<1x1xf32, #tpu.memory_space<vmem>>, vector<1x1xf32>
    %29 = vector.broadcast %28 : vector<1x1xf32> to vector<1x128xf32>
    %30 = arith.addf %27, %29 : vector<1x128xf32>
    %cst_23 = arith.constant 0.000000e+00 : f32
    %31 = vector.broadcast %cst_23 : f32 to vector<1x128xf32>
    %32 = arith.maximumf %30, %31 : vector<1x128xf32>
    %c0_24 = arith.constant 0 : index
    %c0_25 = arith.constant 0 : index
    %33 = vector.load %arg10[%c0_24, %c0_25] : memref<1x128xf32, #tpu.memory_space<vmem>>, vector<1x128xf32>
    tpu.vector_store %arg10[%c0_24, %c0_25], %32 {strides = array<i32>} : memref<1x128xf32, #tpu.memory_space<vmem>>, vector<1x128xf32>,
    return
  }
  func.func @transform_0(%arg0: i32) -> (i32, i32) {
    %c0_i32 = arith.constant 0 : i32
    %c0_i32_0 = arith.constant 0 : i32
    return %arg0, %c0_i32 : i32, i32
  }
  func.func @transform_1(%arg0: i32) -> (i32, i32) {
    %c0_i32 = arith.constant 0 : i32
    %c0_i32_0 = arith.constant 0 : i32
    %c0_i32_1 = arith.constant 0 : i32
    return %c0_i32, %c0_i32_0 : i32, i32
  }
  func.func @transform_2(%arg0: i32) -> (i32, i32) {
    %c0_i32 = arith.constant 0 : i32
    %c0_i32_0 = arith.constant 0 : i32
    %c0_i32_1 = arith.constant 0 : i32
    return %c0_i32, %c0_i32_0 : i32, i32
  }
  func.func @transform_3(%arg0: i32) -> (i32, i32) {
    %c0_i32 = arith.constant 0 : i32
    %c0_i32_0 = arith.constant 0 : i32
    %c0_i32_1 = arith.constant 0 : i32
    return %c0_i32, %c0_i32_0 : i32, i32
  }
  func.func @transform_4(%arg0: i32) -> (i32, i32) {
    %c0_i32 = arith.constant 0 : i32
    %c0_i32_0 = arith.constant 0 : i32
    %c0_i32_1 = arith.constant 0 : i32
    return %c0_i32, %c0_i32_0 : i32, i32
  }
  func.func @transform_5(%arg0: i32) -> (i32, i32) {
    %c0_i32 = arith.constant 0 : i32
    %c0_i32_0 = arith.constant 0 : i32
    %c0_i32_1 = arith.constant 0 : i32
    return %c0_i32, %c0_i32_0 : i32, i32
  }
  func.func @transform_6(%arg0: i32) -> (i32, i32) {
    %c0_i32 = arith.constant 0 : i32
    %c0_i32_0 = arith.constant 0 : i32
    %c0_i32_1 = arith.constant 0 : i32
    return %c0_i32, %c0_i32_0 : i32, i32
  }
  func.func @transform_7(%arg0: i32) -> (i32, i32) {
    %c0_i32 = arith.constant 0 : i32
    %c0_i32_0 = arith.constant 0 : i32
    %c0_i32_1 = arith.constant 0 : i32
    return %c0_i32, %c0_i32_0 : i32, i32
  }
  func.func @transform_8(%arg0: i32) -> (i32, i32) {
    %c0_i32 = arith.constant 0 : i32
    %c0_i32_0 = arith.constant 0 : i32
    %c0_i32_1 = arith.constant 0 : i32
    return %c0_i32, %c0_i32_0 : i32, i32
  }
  func.func @transform_9(%arg0: i32) -> (i32, i32) {
    %c0_i32 = arith.constant 0 : i32
    %c0_i32_0 = arith.constant 0 : i32
    return %c0_i32, %arg0 : i32, i32
  }
}

</mosaic_0001>

<llo_original>
// kernel: tpu_custom_call.1
$region0: #{tpu_custom_call.1}
  #allocation0 [shape = 'u32[]', space=smem, size = 0x4, offset = 0x4, fixed_abs, tag = 'smem constant byte address 0x4 - core index']
  #allocation1 [shape = 'u32[144,128]{1,0:T(1,128)}', space=vmem, size = 0x12000, scoped, tag = 'internal scratch']
  #allocation2 [shape = 'f32[1,1]{1,0:T(1,128)S(1)}', space=vmem, size = 0x200, scoped, tag = 'scoped memory for tpu_custom_call.1']
  %s0 = inlined_call_operand.vmem [shape: f32[128,32], index: 0, kind: input, shape index: {}]
  %s1 = inlined_call_operand.vmem [shape: bf16[32,32], index: 1, kind: input, shape index: {}]
  %s2 = inlined_call_operand.vmem [shape: f32[32,1], index: 2, kind: input, shape index: {}]
  %s3 = inlined_call_operand.vmem [shape: bf16[32,32], index: 3, kind: input, shape index: {}]
  %s4 = inlined_call_operand.vmem [shape: f32[32,1], index: 4, kind: input, shape index: {}]
  %s5 = inlined_call_operand.vmem [shape: bf16[16,32], index: 5, kind: input, shape index: {}]
  %s6 = inlined_call_operand.vmem [shape: f32[16,1], index: 6, kind: input, shape index: {}]
  %s7 = inlined_call_operand.vmem [shape: bf16[1,16], index: 7, kind: input, shape index: {}]
  %s8 = inlined_call_operand.<no memory space> [shape: f32[1,1], index: 8, kind: input, shape index: {}]
  %s9 = inlined_call_operand.hbm [shape: f32[1,128], index: 9, kind: output, shape index: {}]
  %s10 = sld [smem:[#allocation0]]
  $region46: #{tpu_custom_call.1} parent=0
    _
  %s12 = ssub.s32 1, %s10
  %s13 = scalar_select 0, %s12, %s10
  %v14 = vstv %s8
  %15 = vst [vmem:[#allocation2] sm:$0x1] %v14
  $region1: #{tpu_custom_call.1} parent=0
    #allocation3 [shape = 'u8[512]{0}', space=vmem, size = 0x400, scoped, tag = 'output window, operand 0, single buffered']
    #allocation4 [shape = 's32[1]{0}', space=sflag, size = 0x4, scoped, tag = 'scoped memory for tpu_custom_call.1']
    %16 = vsyncpa [#allocation4], 0
    // Predicated region
    $region2: #{tpu_custom_call.1} parent=1 // pred_check
      _
    $region3: #{tpu_custom_call.1} parent=1 // pred_check_branch
      %18 = sbr.rel (0) target = $region5
    $region4: #{tpu_custom_call.1} parent=1 // pred_region
      _
    $region5: #{tpu_custom_call.1} parent=1 // pred_fallthru
      _
    // Predicated region
    $region6: #{tpu_custom_call.1} parent=1 // pred_check
      _
    $region7: #{tpu_custom_call.1} parent=1 // pred_check_branch
      %20 = sbr.rel (0) target = $region9
    $region8: #{tpu_custom_call.1} parent=1 // pred_region
      _
    $region9: #{tpu_custom_call.1} parent=1 // pred_fallthru
      _
    // Predicated region
    $region10: #{tpu_custom_call.1} parent=1 // pred_check
      _
    $region11: #{tpu_custom_call.1} parent=1 // pred_check_branch
      %22 = sbr.rel (0) target = $region13
    $region12: #{tpu_custom_call.1} parent=1 // pred_region
      _
    $region13: #{tpu_custom_call.1} parent=1 // pred_fallthru
      _
    // Predicated region
    $region14: #{tpu_custom_call.1} parent=1 // pred_check
      _
    $region15: #{tpu_custom_call.1} parent=1 // pred_check_branch
      %24 = sbr.rel (0) target = $region17
    $region16: #{tpu_custom_call.1} parent=1 // pred_region
      _
    $region17: #{tpu_custom_call.1} parent=1 // pred_fallthru
      _
    // Predicated region
    $region18: #{tpu_custom_call.1} parent=1 // pred_check
      _
    $region19: #{tpu_custom_call.1} parent=1 // pred_check_branch
      %26 = sbr.rel (0) target = $region21
    $region20: #{tpu_custom_call.1} parent=1 // pred_region
      _
    $region21: #{tpu_custom_call.1} parent=1 // pred_fallthru
      _
    // Predicated region
    $region22: #{tpu_custom_call.1} parent=1 // pred_check
      _
    $region23: #{tpu_custom_call.1} parent=1 // pred_check_branch
      %28 = sbr.rel (0) target = $region25
    $region24: #{tpu_custom_call.1} parent=1 // pred_region
      _
    $region25: #{tpu_custom_call.1} parent=1 // pred_fallthru
      _
    // Predicated region
    $region26: #{tpu_custom_call.1} parent=1 // pred_check
      _
    $region27: #{tpu_custom_call.1} parent=1 // pred_check_branch
      %30 = sbr.rel (0) target = $region29
    $region28: #{tpu_custom_call.1} parent=1 // pred_region
      _
    $region29: #{tpu_custom_call.1} parent=1 // pred_fallthru
      _
    // Predicated region
    $region30: #{tpu_custom_call.1} parent=1 // pred_check
      _
    $region31: #{tpu_custom_call.1} parent=1 // pred_check_branch
      %32 = sbr.rel (0) target = $region33
    $region32: #{tpu_custom_call.1} parent=1 // pred_region
      _
    $region33: #{tpu_custom_call.1} parent=1 // pred_fallthru
      _
    // Predicated region
    $region34: #{tpu_custom_call.1} parent=1 // pred_check
      _
    $region35: #{tpu_custom_call.1} parent=1 // pred_check_branch
      %34 = sbr.rel (0) target = $region37
    $region36: #{tpu_custom_call.1} parent=1 // pred_region
      _
    $region37: #{tpu_custom_call.1} parent=1 // pred_fallthru
      _
    %v36 = vld [vmem:[%s0] sm:$0xff]
    %v37 = vld [vmem:[%s0 + $0x8] sm:$0xff]
    %v38 = vld [vmem:[%s0 + $0x10] sm:$0xff]
    %v39 = vld [vmem:[%s0 + $0x18] sm:$0xff]
    %v40 = vld [vmem:[%s0 + $0x20] sm:$0xff]
    %v41 = vld [vmem:[%s0 + $0x28] sm:$0xff]
    %v42 = vld [vmem:[%s0 + $0x30] sm:$0xff]
    %v43 = vld [vmem:[%s0 + $0x38] sm:$0xff]
    %v44 = vld [vmem:[%s0 + $0x40] sm:$0xff]
    %v45 = vld [vmem:[%s0 + $0x48] sm:$0xff]
    %v46 = vld [vmem:[%s0 + $0x50] sm:$0xff]
    %v47 = vld [vmem:[%s0 + $0x58] sm:$0xff]
    %v48 = vld [vmem:[%s0 + $0x60] sm:$0xff]
    %v49 = vld [vmem:[%s0 + $0x68] sm:$0xff]
    %v50 = vld [vmem:[%s0 + $0x70] sm:$0xff]
    %v51 = vld [vmem:[%s0 + $0x78] sm:$0xff]
    %v52 = vpack.c.bf16 %v37, %v36
    %v53 = vpack.c.bf16 %v39, %v38
    %v54 = vpack.c.bf16 %v41, %v40
    %v55 = vpack.c.bf16 %v43, %v42
    %v56 = vpack.c.bf16 %v45, %v44
    %v57 = vpack.c.bf16 %v47, %v46
    %v58 = vpack.c.bf16 %v49, %v48
    %v59 = vpack.c.bf16 %v51, %v50
    %v60 = vld [vmem:[%s1] sm:$0xf]
    %v61 = vld [vmem:[%s1 + $0x4] sm:$0xf]
    %v62 = vld [vmem:[%s1 + $0x8] sm:$0xf]
    %v63 = vld [vmem:[%s1 + $0xc] sm:$0xf]
    %v64 = vld [vmem:[%s2] sm:$0xff]
    %v65 = vld [vmem:[%s2 + $0x8] sm:$0xff]
    %v66 = vld [vmem:[%s2 + $0x10] sm:$0xff]
    %v67 = vld [vmem:[%s2 + $0x18] sm:$0xff]
    %69 = vset.pattern.permute.xlu0 0
    %70 = vperm.xlu0 %69, %v64
    %v71 = vpop.permute.xlu0 %70
    %74 = vset.pattern.permute.xlu0 0
    %75 = vperm.xlu0 %74, %v65
    %v76 = vpop.permute.xlu0 %75
    %79 = vset.pattern.permute.xlu0 0
    %80 = vperm.xlu0 %79, %v66
    %v81 = vpop.permute.xlu0 %80
    %84 = vset.pattern.permute.xlu0 0
    %85 = vperm.xlu0 %84, %v67
    %v86 = vpop.permute.xlu0 %85
    %v92 = vunpack.c.l.b16 %v60
    %v93 = vunpack.c.l.b16 %v61
    %v94 = vunpack.c.l.b16 %v62
    %v95 = vunpack.c.l.b16 %v63
    %v96 = vpack.c.b16 %v93, %v92
    %v97 = vpack.c.b16 %v95, %v94
    %vm98 = vcmask 261120
    %v100 = vsel %vm98, %v96, 0
    %v103 = vsel %vm98, %v97, 0
    %v106 = vsel %vm98, %v52, 0
    %v109 = vsel %vm98, %v53, 0
    %v112 = vsel %vm98, %v54, 0
    %v115 = vsel %vm98, %v55, 0
    %v118 = vsel %vm98, %v56, 0
    %v121 = vsel %vm98, %v57, 0
    %v124 = vsel %vm98, %v58, 0
    %v127 = vsel %vm98, %v59, 0
    %129 = vmatprep.subr.bf16.mxu0 0
    %130 = vmatpush1.bf16.xpose.msra.mxu0 %v106
    %131 = vmatprep.subr.bf16.mxu0 0
    %132 = vmatpush1.bf16.xpose.msra.mxu0 %v109
    %133 = vmatprep.subr.bf16.mxu0 0
    %134 = vmatpush1.bf16.xpose.msra.mxu0 %v112
    %135 = vmatprep.subr.bf16.mxu0 0
    %136 = vmatpush1.bf16.xpose.msra.mxu0 %v115
    %137 = vmatprep.subr.bf16.mxu0 0
    %138 = vmatpush1.bf16.xpose.msra.mxu0 %v118
    %139 = vmatprep.subr.bf16.mxu0 0
    %140 = vmatpush1.bf16.xpose.msra.mxu0 %v121
    %141 = vmatprep.subr.bf16.mxu0 0
    %142 = vmatpush1.bf16.xpose.msra.mxu0 %v124
    %143 = vmatprep.subr.bf16.mxu0 0
    %144 = vmatpush1.bf16.xpose.msra.mxu0 %v127
    %145 = vmatprep.subr.bf16.mxu0 0
    %146 = vmatpush1.bf16.xpose.msra.mxu0 0
    %147 = vmatprep.subr.bf16.mxu0 0
    %148 = vmatpush1.bf16.xpose.msra.mxu0 0
    %149 = vmatprep.subr.bf16.mxu0 0
    %150 = vmatpush1.bf16.xpose.msra.mxu0 0
    %151 = vmatprep.subr.bf16.mxu0 0
    %152 = vmatpush1.bf16.xpose.msra.mxu0 0
    %153 = vmatprep.subr.bf16.mxu0 0
    %154 = vmatpush1.bf16.xpose.msra.mxu0 0
    %155 = vmatprep.subr.bf16.mxu0 0
    %156 = vmatpush1.bf16.xpose.msra.mxu0 0
    %157 = vmatprep.subr.bf16.mxu0 0
    %158 = vmatpush1.bf16.xpose.msra.mxu0 0
    %159 = vmatprep.subr.bf16.mxu0 0
    %160 = vmatpush1.bf16.xpose.msra.mxu0 0
    %161 = vmatprep.mubr.bf16.mxu0 0
    %162 = vmatmul.mubr.bf16.gmra.mrb[0].mxu0 %v100
    %v163 = vpop.f32.mrb[0].mxu0
    %v164 = vadd.f32 %v71, %v163
    %v165 = vpop.f32.mrb[0].mxu0
    %v166 = vpop.f32.mrb[0].mxu0
    %v167 = vadd.f32 %v76, %v166
    %v168 = vpop.f32.mrb[0].mxu0
    %169 = vmatprep.mubr.bf16.mxu0 0
    %170 = vmatmul.mubr.bf16.gmra.mrb[0].mxu0 %v103
    %v171 = vpop.f32.mrb[0].mxu0
    %v172 = vadd.f32 %v81, %v171
    %v173 = vpop.f32.mrb[0].mxu0
    %v174 = vpop.f32.mrb[0].mxu0
    %v175 = vadd.f32 %v86, %v174
    %v176 = vpop.f32.mrb[0].mxu0
    %177 = vdwg.mxu0
    %v178 = vmax.f32 %v164, 0.0
    %v179 = vmax.f32 %v167, 0.0
    %v180 = vmax.f32 %v172, 0.0
    %v181 = vmax.f32 %v175, 0.0
    %v182 = vpack.c.bf16 %v179, %v178
    %v183 = vpack.c.bf16 %v181, %v180
    %v184 = vld [vmem:[%s3] sm:$0xf]
    %v185 = vld [vmem:[%s3 + $0x4] sm:$0xf]
    %v186 = vld [vmem:[%s3 + $0x8] sm:$0xf]
    %v187 = vld [vmem:[%s3 + $0xc] sm:$0xf]
    %v188 = vld [vmem:[%s4] sm:$0xff]
    %v189 = vld [vmem:[%s4 + $0x8] sm:$0xff]
    %v190 = vld [vmem:[%s4 + $0x10] sm:$0xff]
    %v191 = vld [vmem:[%s4 + $0x18] sm:$0xff]
    %193 = vset.pattern.permute.xlu0 0
    %194 = vperm.xlu0 %193, %v188
    %v195 = vpop.permute.xlu0 %194
    %198 = vset.pattern.permute.xlu0 0
    %199 = vperm.xlu0 %198, %v189
    %v200 = vpop.permute.xlu0 %199
    %203 = vset.pattern.permute.xlu0 0
    %204 = vperm.xlu0 %203, %v190
    %v205 = vpop.permute.xlu0 %204
    %208 = vset.pattern.permute.xlu0 0
    %209 = vperm.xlu0 %208, %v191
    %v210 = vpop.permute.xlu0 %209
    %v216 = vunpack.c.l.b16 %v184
    %v217 = vunpack.c.l.b16 %v185
    %v218 = vunpack.c.l.b16 %v186
    %v219 = vunpack.c.l.b16 %v187
    %v220 = vpack.c.b16 %v217, %v216
    %v221 = vpack.c.b16 %v219, %v218
    %v223 = vsel %vm98, %v220, 0
    %v226 = vsel %vm98, %v221, 0
    %228 = vmatprep.subr.bf16.mxu0 0
    %229 = vmatpush1.bf16.msra.mxu0 %v182
    %230 = vmatprep.subr.bf16.mxu0 0
    %231 = vmatpush1.bf16.msra.mxu0 %v183
    %232 = vmatprep.subr.bf16.mxu0 0
    %233 = vmatpush1.bf16.msra.mxu0 0
    %234 = vmatprep.subr.bf16.mxu0 0
    %235 = vmatpush1.bf16.msra.mxu0 0
    %236 = vmatprep.subr.bf16.mxu0 0
    %237 = vmatpush1.bf16.msra.mxu0 0
    %238 = vmatprep.subr.bf16.mxu0 0
    %239 = vmatpush1.bf16.msra.mxu0 0
    %240 = vmatprep.subr.bf16.mxu0 0
    %241 = vmatpush1.bf16.msra.mxu0 0
    %242 = vmatprep.subr.bf16.mxu0 0
    %243 = vmatpush1.bf16.msra.mxu0 0
    %244 = vmatprep.subr.bf16.mxu0 0
    %245 = vmatpush1.bf16.msra.mxu0 0
    %246 = vmatprep.subr.bf16.mxu0 0
    %247 = vmatpush1.bf16.msra.mxu0 0
    %248 = vmatprep.subr.bf16.mxu0 0
    %249 = vmatpush1.bf16.msra.mxu0 0
    %250 = vmatprep.subr.bf16.mxu0 0
    %251 = vmatpush1.bf16.msra.mxu0 0
    %252 = vmatprep.subr.bf16.mxu0 0
    %253 = vmatpush1.bf16.msra.mxu0 0
    %254 = vmatprep.subr.bf16.mxu0 0
    %255 = vmatpush1.bf16.msra.mxu0 0
    %256 = vmatprep.subr.bf16.mxu0 0
    %257 = vmatpush1.bf16.msra.mxu0 0
    %258 = vmatprep.subr.bf16.mxu0 0
    %259 = vmatpush1.bf16.msra.mxu0 0
    %260 = vmatprep.mubr.bf16.mxu0 0
    %261 = vmatmul.mubr.bf16.gmra.mrb[0].mxu0 %v223
    %v262 = vpop.f32.mrb[0].mxu0
    %v263 = vadd.f32 %v195, %v262
    %v264 = vpop.f32.mrb[0].mxu0
    %v265 = vpop.f32.mrb[0].mxu0
    %v266 = vadd.f32 %v200, %v265
    %v267 = vpop.f32.mrb[0].mxu0
    %268 = vmatprep.mubr.bf16.mxu0 0
    %269 = vmatmul.mubr.bf16.gmra.mrb[0].mxu0 %v226
    %v270 = vpop.f32.mrb[0].mxu0
    %v271 = vadd.f32 %v205, %v270
    %v272 = vpop.f32.mrb[0].mxu0
    %v273 = vpop.f32.mrb[0].mxu0
    %v274 = vadd.f32 %v210, %v273
    %v275 = vpop.f32.mrb[0].mxu0
    %276 = vdwg.mxu0
    %v277 = vmax.f32 %v263, 0.0
    %v278 = vmax.f32 %v266, 0.0
    %v279 = vmax.f32 %v271, 0.0
    %v280 = vmax.f32 %v274, 0.0
    %v281 = vpack.c.bf16 %v278, %v277
    %v282 = vpack.c.bf16 %v280, %v279
    %v283 = vld [vmem:[%s5] sm:$0xf]
    %v284 = vld [vmem:[%s5 + $0x4] sm:$0xf]
    %v285 = vld [vmem:[%s6] sm:$0xff]
    %v286 = vld [vmem:[%s6 + $0x8] sm:$0xff]
    %288 = vset.pattern.permute.xlu0 0
    %289 = vperm.xlu0 %288, %v285
    %v290 = vpop.permute.xlu0 %289
    %293 = vset.pattern.permute.xlu0 0
    %294 = vperm.xlu0 %293, %v286
    %v295 = vpop.permute.xlu0 %294
    %v299 = vunpack.c.l.b16 %v283
    %v300 = vunpack.c.l.b16 %v284
    %v301 = vpack.c.b16 %v300, %v299
    %v303 = vsel %vm98, %v301, 0
    %305 = vmatprep.subr.bf16.mxu0 0
    %306 = vmatpush1.bf16.msra.mxu0 %v281
    %307 = vmatprep.subr.bf16.mxu0 0
    %308 = vmatpush1.bf16.msra.mxu0 %v282
    %309 = vmatprep.subr.bf16.mxu0 0
    %310 = vmatpush1.bf16.msra.mxu0 0
    %311 = vmatprep.subr.bf16.mxu0 0
    %312 = vmatpush1.bf16.msra.mxu0 0
    %313 = vmatprep.subr.bf16.mxu0 0
    %314 = vmatpush1.bf16.msra.mxu0 0
    %315 = vmatprep.subr.bf16.mxu0 0
    %316 = vmatpush1.bf16.msra.mxu0 0
    %317 = vmatprep.subr.bf16.mxu0 0
    %318 = vmatpush1.bf16.msra.mxu0 0
    %319 = vmatprep.subr.bf16.mxu0 0
    %320 = vmatpush1.bf16.msra.mxu0 0
    %321 = vmatprep.subr.bf16.mxu0 0
    %322 = vmatpush1.bf16.msra.mxu0 0
    %323 = vmatprep.subr.bf16.mxu0 0
    %324 = vmatpush1.bf16.msra.mxu0 0
    %325 = vmatprep.subr.bf16.mxu0 0
    %326 = vmatpush1.bf16.msra.mxu0 0
    %327 = vmatprep.subr.bf16.mxu0 0
    %328 = vmatpush1.bf16.msra.mxu0 0
    %329 = vmatprep.subr.bf16.mxu0 0
    %330 = vmatpush1.bf16.msra.mxu0 0
    %331 = vmatprep.subr.bf16.mxu0 0
    %332 = vmatpush1.bf16.msra.mxu0 0
    %333 = vmatprep.subr.bf16.mxu0 0
    %334 = vmatpush1.bf16.msra.mxu0 0
    %335 = vmatprep.subr.bf16.mxu0 0
    %336 = vmatpush1.bf16.msra.mxu0 0
    %337 = vmatprep.mubr.bf16.mxu0 0
    %338 = vmatmul.mubr.bf16.gmra.mrb[0].mxu0 %v303
    %v339 = vpop.f32.mrb[0].mxu0
    %v340 = vadd.f32 %v290, %v339
    %v341 = vpop.f32.mrb[0].mxu0
    %v342 = vpop.f32.mrb[0].mxu0
    %v343 = vadd.f32 %v295, %v342
    %v344 = vpop.f32.mrb[0].mxu0
    %345 = vdwg.mxu0
    %v346 = vmax.f32 %v340, 0.0
    %v347 = vmax.f32 %v343, 0.0
    %v348 = vpack.c.bf16 %v347, %v346
    %v349 = vld [vmem:[%s7] sm:$0x1]
    %v350 = vld [vmem:[#allocation2] sm:$0x1]
    %352 = vset.pattern.permute.xlu0 0
    %353 = vperm.xlu0 %352, %v350
    %v354 = vpop.permute.xlu0 %353
    %v356 = vlaneseq
    %v357 = vshrl.u32 %v356, 7
    %v358 = vsub.s32 0, %v357
    %v359 = vrot.slane %v354, %v358
    %vm360 = vcmask 130048
    %v362 = vsel %vm360, %v349, 0
    %364 = vmatprep.subr.bf16.mxu0 0
    %365 = vmatpush1.bf16.msra.mxu0 %v348
    %366 = vmatprep.subr.bf16.mxu0 0
    %367 = vmatpush1.bf16.msra.mxu0 0
    %368 = vmatprep.subr.bf16.mxu0 0
    %369 = vmatpush1.bf16.msra.mxu0 0
    %370 = vmatprep.subr.bf16.mxu0 0
    %371 = vmatpush1.bf16.msra.mxu0 0
    %372 = vmatprep.subr.bf16.mxu0 0
    %373 = vmatpush1.bf16.msra.mxu0 0
    %374 = vmatprep.subr.bf16.mxu0 0
    %375 = vmatpush1.bf16.msra.mxu0 0
    %376 = vmatprep.subr.bf16.mxu0 0
    %377 = vmatpush1.bf16.msra.mxu0 0
    %378 = vmatprep.subr.bf16.mxu0 0
    %379 = vmatpush1.bf16.msra.mxu0 0
    %380 = vmatprep.subr.bf16.mxu0 0
    %381 = vmatpush1.bf16.msra.mxu0 0
    %382 = vmatprep.subr.bf16.mxu0 0
    %383 = vmatpush1.bf16.msra.mxu0 0
    %384 = vmatprep.subr.bf16.mxu0 0
    %385 = vmatpush1.bf16.msra.mxu0 0
    %386 = vmatprep.subr.bf16.mxu0 0
    %387 = vmatpush1.bf16.msra.mxu0 0
    %388 = vmatprep.subr.bf16.mxu0 0
    %389 = vmatpush1.bf16.msra.mxu0 0
    %390 = vmatprep.subr.bf16.mxu0 0
    %391 = vmatpush1.bf16.msra.mxu0 0
    %392 = vmatprep.subr.bf16.mxu0 0
    %393 = vmatpush1.bf16.msra.mxu0 0
    %394 = vmatprep.subr.bf16.mxu0 0
    %395 = vmatpush1.bf16.msra.mxu0 0
    %396 = vmatprep.mubr.bf16.mxu0 0
    %397 = vmatmul.mubr.bf16.gmra.mrb[0].mxu0 %v362
    %v398 = vpop.f32.mrb[0].mxu0
    %v399 = vadd.f32 %v359, %v398
    %v400 = vpop.f32.mrb[0].mxu0
    %v401 = vpop.f32.mrb[0].mxu0
    %v402 = vpop.f32.mrb[0].mxu0
    %403 = vdwg.mxu0
    %v404 = vmax.f32 %v399, 0.0
    %405 = vst [vmem:[#allocation3] sm:$0x1] %v404
    // Predicated region
    $region38: #{tpu_custom_call.1} parent=1 // pred_check
      _
    $region39: #{tpu_custom_call.1} parent=1 // pred_check_branch
      %407 = sbr.rel (0) target = $region41
    $region40: #{tpu_custom_call.1} parent=1 // pred_region
      %s409 = ssub.s32 16, 16
      %410 = vsyncadd [#allocation4], %s409
      %s412 = sshll.u32 [#allocation3], 4
      %s413 = int_to_ptr.vmem [resolvable:$true] %s412
      %415 = dma.vmem_to_hbm [thread:$0]  %s413, 16, %s9, [#allocation4]
    $region41: #{tpu_custom_call.1} parent=1 // pred_fallthru
      _
    // Predicated region
    $region42: #{tpu_custom_call.1} parent=1 // pred_check
      _
    $region43: #{tpu_custom_call.1} parent=1 // pred_check_branch
      %417 = sbr.rel (0) target = $region45
    $region44: #{tpu_custom_call.1} parent=1 // pred_region
      %418 = dma.done [#allocation4], 16
    $region45: #{tpu_custom_call.1} parent=1 // pred_fallthru
      _
    %419 = vsyncpa [#allocation4], 1

</llo_original>
